<compile_context>
chip_gen: v5e
topology: v5e:2x2
jax: 0.10.0
libtpu: 0.0.40
codegen_flags: <defaults>
</compile_context>

<pallas_src>
import jax
import jax.numpy as jnp
from jax.experimental import pallas as pl
from jax.experimental.pallas import tpu as pltpu

_LANE = 128
_EPS_SQ = 1e-24  # ~ (torch F.normalize eps=1e-12)^2, applied under the rsqrt


def _spoc_kernel(x_ref, o_ref, acc_ref):
    # x_ref: (TB, C, tk) input tile, o_ref: (TB, C) output block,
    # acc_ref: (TB, C) f32 accumulator scratch (persists across the k axis).
    k = pl.program_id(1)

    @pl.when(k == 0)
    def _():
        acc_ref[...] = jnp.zeros_like(acc_ref)

    # Partial spatial sum of the native-dtype tile, accumulated in f32.
    acc_ref[...] += jnp.sum(x_ref[...], axis=2, dtype=jnp.float32)

    @pl.when(k == pl.num_programs(1) - 1)
    def _():
        s = acc_ref[...]                                  # (TB, C) f32
        sq = jnp.sum(s * s, axis=1, keepdims=True)        # (TB, 1)
        inv = jax.lax.rsqrt(sq + _EPS_SQ)                 # EUP, eps-safe
        o_ref[...] = (s * inv).astype(o_ref.dtype)


def _round_up(x, m):
    return ((x + m - 1) // m) * m


def _choose_hw_tile(tb, c, hw_rounded, itemsize,
                    vmem_budget_bytes=16 * 1024 * 1024):
    """Largest HW tile (multiple of 128) whose double-buffered input fits the
    VMEM budget; conservative enough for v7x's smaller VMEM."""
    denom = 2 * tb * c * itemsize  # 2 = double-buffered input tile
    max_tk = max(_LANE, (vmem_budget_bytes // denom) // _LANE * _LANE)
    return min(max_tk, hw_rounded)


def spoc_before_dimension_reduction(inp):
    """inp: (B, C, H, W) array (NCHW, matching the PyTorch module)."""
    B, C, H, W = inp.shape
    HW = H * W
    x = inp.reshape(B, C, HW)

    # --- batch tiling: TB=8 (aligned, unmasked (8, C) stores) when possible ---
    if B >= 8:
        TB = 8
        Bp = _round_up(B, TB)
    else:
        TB = B          # block equals full batch dim -> allowed by (8,128) rule
        Bp = B

    # --- spatial tiling: pad HW to a multiple of the tile (tile % 128 == 0) ---
    hw128 = _round_up(HW, _LANE)
    tk = _choose_hw_tile(TB, C, hw128, jnp.dtype(inp.dtype).itemsize)
    HWp = _round_up(HW, tk)

    if Bp != B or HWp != HW:
        x = jnp.pad(x, ((0, Bp - B), (0, 0), (0, HWp - HW)))

    grid = (Bp // TB, HWp // tk)

    out = pl.pallas_call(
        _spoc_kernel,
        out_shape=jax.ShapeDtypeStruct((Bp, C), inp.dtype),
        grid_spec=pltpu.PrefetchScalarGridSpec(
            num_scalar_prefetch=0,
            grid=grid,
            in_specs=[
                pl.BlockSpec((TB, C, tk), lambda b, k: (b, 0, k)),
            ],
            # Output block stays resident across the spatial (k) axis; only the
            # last k iteration writes it.
            out_specs=pl.BlockSpec((TB, C), lambda b, k: (b, 0)),
            scratch_shapes=[pltpu.VMEM((TB, C), jnp.float32)],
        ),
        compiler_params=pltpu.CompilerParams(
            dimension_semantics=("parallel", "arbitrary"),
        ),
    )(x)

    return out[:B]


def _reference(inp):
    B, C = inp.shape[0], inp.shape[1]
    s = jnp.sum(inp.reshape(B, C, -1).astype(jnp.float32), axis=2)
    return s / jnp.linalg.norm(s, axis=1, keepdims=True)


if __name__ == "__main__":
    key = jax.random.PRNGKey(0)
    B, C, H, W = 2, 4, 16, 16
    x = jax.random.normal(key, (B, C, H, W), dtype=jnp.float32)

    out = spoc_before_dimension_reduction(x)
    out = jax.block_until_ready(out)

    ref = _reference(x)
    assert out.shape == (B, C), out.shape
    assert out.dtype == x.dtype, out.dtype
    assert jnp.allclose(out.astype(jnp.float32), ref, atol=1e-5, rtol=1e-5), (out, ref)

    # Also exercise a non-128-multiple spatial size and a batch > 8 path.
    x2 = jax.random.normal(jax.random.PRNGKey(1), (9, 4, 7, 7), dtype=jnp.float32)
    out2 = jax.block_until_ready(spoc_before_dimension_reduction(x2))
    ref2 = _reference(x2)
    assert out2.shape == (9, 4), out2.shape
    assert jnp.allclose(out2.astype(jnp.float32), ref2, atol=1e-5, rtol=1e-5)

    print("KERNEL_OK")
</pallas_src>

<mosaic_0001>
module attributes {stable_mosaic.version = 11 : i64} {
  func.func @_spoc_kernel(%arg0: i32, %arg1: i32, %arg2: memref<2x4x256xf32, #tpu.memory_space<vmem>>, %arg3: memref<2x4xf32, #tpu.memory_space<vmem>>, %arg4: memref<2x4xf32, #tpu.memory_space<vmem>>) attributes {dimension_semantics = [#tpu.dimension_semantics<parallel>, #tpu.dimension_semantics<arbitrary>], iteration_bounds = array<i64: 1, 1>, scalar_prefetch = 0 : i64, scratch_operands = 1 : i64, tpu.core_type = #tpu.core_type<tc>, window_params = [{transform_indices = @transform_0, window_bounds = array<i64: 2, 4, 256>}, {transform_indices = @transform_1, window_bounds = array<i64: 2, 4>}]} {
    %c0_i32 = arith.constant 0 : i32
    %0 = arith.cmpi eq, %arg1, %c0_i32 : i32
    %1 = arith.extui %0 : i1 to i32
    %c0_i32_0 = arith.constant 0 : i32
    %2 = arith.cmpi ne, %1, %c0_i32_0 : i32
    scf.if %2 {
      %cst_9 = arith.constant 0.000000e+00 : f32
      %11 = vector.broadcast %cst_9 : f32 to vector<2x4xf32>
      %c0_10 = arith.constant 0 : index
      %c0_11 = arith.constant 0 : index
      %12 = vector.load %arg4[%c0_10, %c0_11] : memref<2x4xf32, #tpu.memory_space<vmem>>, vector<2x4xf32>
      tpu.vector_store %arg4[%c0_10, %c0_11], %11 {strides = array<i32>} : memref<2x4xf32, #tpu.memory_space<vmem>>, vector<2x4xf32>,
    } else {
    }
    %c0 = arith.constant 0 : index
    %c0_1 = arith.constant 0 : index
    %3 = vector.load %arg4[%c0, %c0_1] : memref<2x4xf32, #tpu.memory_space<vmem>>, vector<2x4xf32>
    %c0_2 = arith.constant 0 : index
    %c0_3 = arith.constant 0 : index
    %c0_4 = arith.constant 0 : index
    %4 = vector.load %arg2[%c0_2, %c0_3, %c0_4] : memref<2x4x256xf32, #tpu.memory_space<vmem>>, vector<2x4x256xf32>
    %cst = arith.constant dense<0.000000e+00> : vector<2x4xf32>
    %5 = vector.multi_reduction <add>, %4, %cst [2] : vector<2x4x256xf32> to vector<2x4xf32>
    %6 = arith.addf %3, %5 : vector<2x4xf32>
    %c0_5 = arith.constant 0 : index
    %c0_6 = arith.constant 0 : index
    %7 = vector.load %arg4[%c0_5, %c0_6] : memref<2x4xf32, #tpu.memory_space<vmem>>, vector<2x4xf32>
    tpu.vector_store %arg4[%c0_5, %c0_6], %6 {strides = array<i32>} : memref<2x4xf32, #tpu.memory_space<vmem>>, vector<2x4xf32>,
    %c0_i32_7 = arith.constant 0 : i32
    %8 = arith.cmpi eq, %arg1, %c0_i32_7 : i32
    %9 = arith.extui %8 : i1 to i32
    %c0_i32_8 = arith.constant 0 : i32
    %10 = arith.cmpi ne, %9, %c0_i32_8 : i32
    scf.if %10 {
      %c0_9 = arith.constant 0 : index
      %c0_10 = arith.constant 0 : index
      %11 = vector.load %arg4[%c0_9, %c0_10] : memref<2x4xf32, #tpu.memory_space<vmem>>, vector<2x4xf32>
      %12 = arith.mulf %11, %11 : vector<2x4xf32>
      %cst_11 = arith.constant dense<0.000000e+00> : vector<2xf32>
      %13 = vector.multi_reduction <add>, %12, %cst_11 [1] : vector<2x4xf32> to vector<2xf32>
      %14 = vector.shape_cast %13 : vector<2xf32> to vector<2x1xf32>
      %cst_12 = arith.constant 1.000000e-24 : f32
      %15 = vector.broadcast %cst_12 : f32 to vector<2x1xf32>
      %16 = arith.addf %14, %15 : vector<2x1xf32>
      %17 = math.rsqrt %16 : vector<2x1xf32>
      %18 = vector.broadcast %17 : vector<2x1xf32> to vector<2x4xf32>
      %19 = arith.mulf %11, %18 : vector<2x4xf32>
      %c0_13 = arith.constant 0 : index
      %c0_14 = arith.constant 0 : index
      %20 = vector.load %arg3[%c0_13, %c0_14] : memref<2x4xf32, #tpu.memory_space<vmem>>, vector<2x4xf32>
      tpu.vector_store %arg3[%c0_13, %c0_14], %19 {strides = array<i32>} : memref<2x4xf32, #tpu.memory_space<vmem>>, vector<2x4xf32>,
    } else {
    }
    return
  }
  func.func @transform_0(%arg0: i32, %arg1: i32) -> (i32, i32, i32) {
    %c0_i32 = arith.constant 0 : i32
    %c0_i32_0 = arith.constant 0 : i32
    return %arg0, %c0_i32, %arg1 : i32, i32, i32
  }
  func.func @transform_1(%arg0: i32, %arg1: i32) -> (i32, i32) {
    %c0_i32 = arith.constant 0 : i32
    %c0_i32_0 = arith.constant 0 : i32
    return %arg0, %c0_i32 : i32, i32
  }
}

</mosaic_0001>

<llo_original>
// kernel: tpu_custom_call.1
$region0: #{tpu_custom_call.1}
  #allocation0 [shape = 'u32[]', space=smem, size = 0x4, offset = 0x4, fixed_abs, tag = 'smem constant byte address 0x4 - core index']
  #allocation1 [shape = 'u32[72,128]{1,0:T(1,128)}', space=vmem, size = 0x9000, scoped, tag = 'internal scratch']
  #allocation2 [shape = 'f32[2,4]{1,0:T(2,128)}', space=vmem, size = 0x400, scoped, tag = 'scratch operand']
  %s0 = inlined_call_operand.hbm [shape: f32[2,4,256], index: 0, kind: input, shape index: {}]
  %s1 = inlined_call_operand.hbm [shape: f32[2,4], index: 1, kind: output, shape index: {}]
  %s2 = sld [smem:[#allocation0]]
  $region26: #{tpu_custom_call.1} parent=0
    _
  %s4 = ssub.s32 1, %s2
  %s5 = scalar_select 0, %s4, %s2
  $region1: #{tpu_custom_call.1} parent=0
    #allocation3 [shape = 'u8[8192]{0}', space=vmem, size = 0x2000, scoped, tag = 'input window, operand 0, single buffered']
    #allocation4 [shape = 's32[1]{0}', space=sflag, size = 0x4, scoped, tag = 'scoped memory for tpu_custom_call.1']
    #allocation5 [shape = 's32[1]{0}', space=sflag, size = 0x4, scoped, tag = 'scoped memory for tpu_custom_call.1']
    #allocation6 [shape = 'u8[1024]{0}', space=vmem, size = 0x400, scoped, tag = 'output window, operand 0, single buffered']
    %6 = vsyncpa [#allocation4], 0
    %7 = vsyncpa [#allocation5], 0
    // Predicated region
    $region2: #{tpu_custom_call.1} parent=1 // pred_check
      _
    $region3: #{tpu_custom_call.1} parent=1 // pred_check_branch
      %9 = sbr.rel (0) target = $region5
    $region4: #{tpu_custom_call.1} parent=1 // pred_region
      %11 = vsyncadd [#allocation4], 0
      %s12 = sshll.u32 %s0, 4
      %s13 = int_to_ptr.hbm [resolvable:$true] %s12
      %s14 = sshll.u32 [#allocation3], 4
      %s15 = int_to_ptr.vmem [resolvable:$true] %s14
      %20 = dma.hbm_to_vmem [thread:$0]  %s13, 256, %s15, [#allocation4], 128, 128, 8
    $region5: #{tpu_custom_call.1} parent=1 // pred_fallthru
      _
    // Predicated region
    $region6: #{tpu_custom_call.1} parent=1 // pred_check
      _
    $region7: #{tpu_custom_call.1} parent=1 // pred_check_branch
      %22 = sbr.rel (0) target = $region9
    $region8: #{tpu_custom_call.1} parent=1 // pred_region
      %24 = dma.done [#allocation4], 256
    $region9: #{tpu_custom_call.1} parent=1 // pred_fallthru
      _
    %p25 = scmp.eq.s32.totalorder 0, 0
    // Predicated region
    $region10: #{tpu_custom_call.1} parent=1 // pred_check
      %p26 = pneg %p25
    $region11: #{tpu_custom_call.1} parent=1 // pred_check_branch
      %28 = sbr.rel (%p26) target = $region13
    $region12: #{tpu_custom_call.1} parent=1 // pred_region
      %vm29 = vcmask 25600
      %30 = vst.msk [vmem:[#allocation2] sm:$0x3] %vm29, 0.0
    $region13: #{tpu_custom_call.1} parent=1 // pred_fallthru
      _
    %v31 = vld [vmem:[#allocation2] sm:$0x3]
    %v32 = vld [vmem:[#allocation3] sm:$0xff]
    %v33 = vld [vmem:[#allocation3 + $0x8] sm:$0xff]
    %36 = vst [vmem:[#allocation1] ss:$2 sm:$0xff] %v32
    %v37 = vld.sshfl [vmem:[#allocation1] sm:$0xff pattern:$0x75316420]
    %v38 = vld.sshfl [vmem:[#allocation1 + $0x8] sm:$0xff pattern:$0x75316420]
    %s39 = scalar_lea.vmem [#allocation1], 16
    %40 = vst [vmem:[%s39] ss:$2 sm:$0xff] %v33
    %v41 = vld.sshfl [vmem:[#allocation1 + $0x10] sm:$0xff pattern:$0x75316420]
    %v42 = vld.sshfl [vmem:[#allocation1 + $0x18] sm:$0xff pattern:$0x75316420]
    %vm47 = vcmask 1043456
    %v48 = vsel %vm47, %v37, 0.0
    %v49 = vsel %vm47, %v38, 0.0
    %v50 = vadd.f32 %v48, %v49
    %51 = vadd.xlane.f32.xlu0 %v50
    %v52 = vpop.xlane.xlu0 %51
    %v53 = vsel %vm47, %v41, 0.0
    %v54 = vsel %vm47, %v42, 0.0
    %v55 = vadd.f32 %v53, %v54
    %56 = vadd.xlane.f32.xlu0 %v55
    %v57 = vpop.xlane.xlu0 %56
    %v60 = vlaneseq
    %v61 = vand.u32 %v60, 127
    %v62 = vperm.slane %v52, %v61
    %v63 = vperm.slane %v57, %v61
    %vm64 = vcmask 1041409
    %v65 = vsel %vm64, %v63, %v62
    %v67 = vadd.f32 %v31, %v65
    %vm68 = vcmask 25600
    %69 = vst.msk [vmem:[#allocation2] sm:$0x3] %vm68, %v67
    // Predicated region
    $region14: #{tpu_custom_call.1} parent=1 // pred_check
      %p70 = pneg %p25
    $region15: #{tpu_custom_call.1} parent=1 // pred_check_branch
      %72 = sbr.rel (%p70) target = $region17
    $region16: #{tpu_custom_call.1} parent=1 // pred_region
      %v73 = vld [vmem:[#allocation2] sm:$0x3]
      %v74 = vmul.f32 %v73, %v73
      %v75 = vsel %vm68, %v74, 0.0
      %76 = vadd.xlane.f32.xlu0 %v75
      %v77 = vpop.xlane.xlu0 %76
      %v78 = vadd.f32 %v77, 1e-24
      %v79 = vrsqrt.pop %v78
      %v80 = vmul.f32 %v79, %v78
      %v81 = vmul.f32 %v80, %v79
      %v82 = vmul.f32 0.5, %v81
      %v83 = vsub.f32 1.5, %v82
      %v84 = vmul.f32 %v79, %v83
      %vm85 = vweird.f32 %v78
      %vm86 = vweird.f32 %v79
      %vm87 = vmor %vm85, %vm86
      %v88 = vsel %vm87, %v79, %v84
      %v89 = vmul.f32 %v73, %v88
      %90 = vst.msk [vmem:[#allocation6] sm:$0x3] %vm68, %v89
    $region17: #{tpu_custom_call.1} parent=1 // pred_fallthru
      _
    // Predicated region
    $region18: #{tpu_custom_call.1} parent=1 // pred_check
      _
    $region19: #{tpu_custom_call.1} parent=1 // pred_check_branch
      %92 = sbr.rel (0) target = $region21
    $region20: #{tpu_custom_call.1} parent=1 // pred_region
      %94 = vsyncadd [#allocation5], 0
      %s96 = sshll.u32 [#allocation6], 4
      %s97 = int_to_ptr.vmem [resolvable:$true] %s96
      %s98 = sshll.u32 %s1, 4
      %s99 = int_to_ptr.hbm [resolvable:$true] %s98
      %101 = dma.vmem_to_hbm [thread:$0]  %s97, 32, %s99, [#allocation5]
    $region21: #{tpu_custom_call.1} parent=1 // pred_fallthru
      _
    // Predicated region
    $region22: #{tpu_custom_call.1} parent=1 // pred_check
      _
    $region23: #{tpu_custom_call.1} parent=1 // pred_check_branch
      %103 = sbr.rel (0) target = $region25
    $region24: #{tpu_custom_call.1} parent=1 // pred_region
      %105 = dma.done [#allocation5], 32
    $region25: #{tpu_custom_call.1} parent=1 // pred_fallthru
      _
    %106 = vsyncpa [#allocation4], 1
    %107 = vsyncpa [#allocation5], 1

</llo_original>
